<compile_context>
chip_gen: v7x
topology: tpu7x:2x2x1
jax: 0.10.0
libtpu: 0.0.40
codegen_flags: <defaults>
</compile_context>

<pallas_src>
import jax
import jax.numpy as jnp
from jax.experimental import pallas as pl
from jax.experimental.pallas import tpu as pltpu


def _round_up(a, m):
    return ((a + m - 1) // m) * m


def class_head_kernel(x_ref, w_ref, b_ref, o_ref, acc_ref):
    # x_ref: (tile_b, C_pad, tile_s)  w_ref: (C_pad, N_pad)  b_ref: (1, N_pad)
    # o_ref: (tile_b, N_pad)          acc_ref: (tile_b, C_pad) f32 scratch
    s = pl.program_id(1)

    @pl.when(s == 0)
    def _init():
        acc_ref[...] = jnp.zeros_like(acc_ref)

    # Partial spatial sum accumulated in f32 without materializing an upcast copy of
    # the whole tile (lane-axis reduce -> XLU slot; DMA/vld remain the bottleneck).
    acc_ref[...] += jnp.sum(x_ref[...], axis=-1, dtype=jnp.float32)

    @pl.when(s == pl.num_programs(1) - 1)
    def _finalize():
        pooled = acc_ref[...]  # f32 sums; 1/(H*W) already folded into the weight.
        logits = jnp.dot(pooled, w_ref[...], preferred_element_type=jnp.float32)
        o_ref[...] = (logits + b_ref[...].astype(jnp.float32)).astype(o_ref.dtype)


def class_head(x, weight, bias, *, tile_s_max=1024, x_block_budget_bytes=4 << 20):
    """x: (B, C, H, W) NCHW (or a list/tuple whose first element is that array);
    weight: (num_classes, C); bias: (num_classes,)."""
    x = x[0] if isinstance(x, (list, tuple)) else x
    B, C, H, W = x.shape
    N = weight.shape[0]
    S = H * W
    dtype_bytes = jnp.dtype(x.dtype).itemsize

    # ---- host-side layout prep (lane/sublane dense, zero padding) ----
    C_pad = _round_up(C, 8)                      # sublane axis of the x block
    N_pad = _round_up(N, 128)                    # lane-dense output / weight
    tile_s = min(_round_up(S, 128), tile_s_max)  # lane axis, multiple of 128
    S_pad = _round_up(S, tile_s)

    # Batch tile: multiple of 8, sized so double-buffered x blocks fit comfortably in
    # scoped VMEM on all generations (v5e 16 MiB default, v6e/v7x 32 MiB).
    tile_b = max(8, (x_block_budget_bytes // (C_pad * tile_s * dtype_bytes)) // 8 * 8)
    tile_b = min(tile_b, max(8, _round_up(B, 8)))
    B_pad = _round_up(B, tile_b)

    x_flat = x.reshape(B, C, S)                  # free reshape, no transpose
    x_pad = jnp.pad(x_flat, ((0, B_pad - B), (0, C_pad - C), (0, S_pad - S)))

    # Fold the 1/(H*W) pooling scale into the weight (read once, resident in VMEM).
    w_t = (weight.T / float(S)).astype(weight.dtype)             # (C, N)
    w_pad = jnp.pad(w_t, ((0, C_pad - C), (0, N_pad - N)))
    b_pad = jnp.pad(bias.reshape(1, N), ((0, 0), (0, N_pad - N)))

    grid = (B_pad // tile_b, S_pad // tile_s)

    out = pl.pallas_call(
        class_head_kernel,
        out_shape=jax.ShapeDtypeStruct((B_pad, N_pad), x.dtype),
        grid_spec=pltpu.PrefetchScalarGridSpec(
            num_scalar_prefetch=0,
            grid=grid,
            in_specs=[
                pl.BlockSpec((tile_b, C_pad, tile_s), lambda i, s: (i, 0, s)),
                pl.BlockSpec((C_pad, N_pad), lambda i, s: (0, 0)),   # resident weight
                pl.BlockSpec((1, N_pad), lambda i, s: (0, 0)),       # resident bias
            ],
            out_specs=pl.BlockSpec((tile_b, N_pad), lambda i, s: (i, 0)),
            scratch_shapes=[pltpu.VMEM((tile_b, C_pad), jnp.float32)],
        ),
        compiler_params=pltpu.CompilerParams(
            dimension_semantics=("parallel", "arbitrary"),
            vmem_limit_bytes=32 * 1024 * 1024,
        ),
        cost_estimate=pl.CostEstimate(
            flops=2 * B * C * N,
            transcendentals=0,
            bytes_accessed=B * C * S * dtype_bytes
            + C * N * jnp.dtype(weight.dtype).itemsize
            + B * N * dtype_bytes,
        ),
    )(x_pad, w_pad, b_pad)

    return out[:B, :N]


if __name__ == "__main__":
    key = jax.random.PRNGKey(0)
    k_x, k_w, k_b = jax.random.split(key, 3)

    B, hidden_dim, H, W = 2, 32, 16, 16
    num_classes = 8

    x = jax.random.normal(k_x, (B, hidden_dim, H, W), dtype=jnp.float32)
    # Deterministic Linear init (PyTorch-style uniform +/- 1/sqrt(fan_in)).
    bound = 1.0 / jnp.sqrt(hidden_dim)
    weight = jax.random.uniform(k_w, (num_classes, hidden_dim),
                                minval=-bound, maxval=bound, dtype=jnp.float32)
    bias = jax.random.uniform(k_b, (num_classes,),
                              minval=-bound, maxval=bound, dtype=jnp.float32)

    out = class_head(x, weight, bias)
    out = jax.block_until_ready(out)

    # Pure-JAX reference check.
    ref = jnp.mean(x, axis=(2, 3)) @ weight.T + bias
    assert out.shape == (B, num_classes)
    assert jnp.allclose(out, ref, atol=1e-5, rtol=1e-4), float(jnp.max(jnp.abs(out - ref)))

    print("KERNEL_OK")
</pallas_src>

<mosaic_0001>
module attributes {stable_mosaic.version = 11 : i64} {
  func.func @class_head_kernel(%arg0: i32, %arg1: i32, %arg2: memref<8x32x256xf32, #tpu.memory_space<vmem>>, %arg3: memref<32x128xf32, #tpu.memory_space<vmem>>, %arg4: memref<1x128xf32, #tpu.memory_space<vmem>>, %arg5: memref<8x128xf32, #tpu.memory_space<vmem>>, %arg6: memref<8x32xf32, #tpu.memory_space<vmem>>) attributes {dimension_semantics = [#tpu.dimension_semantics<parallel>, #tpu.dimension_semantics<arbitrary>], iteration_bounds = array<i64: 1, 1>, scalar_prefetch = 0 : i64, scratch_operands = 1 : i64, tpu.core_type = #tpu.core_type<tc>, window_params = [{transform_indices = @transform_0, window_bounds = array<i64: 8, 32, 256>}, {pipeline_mode = #tpu.pipeline_mode<synchronous>, transform_indices = @transform_1, window_bounds = array<i64: 32, 128>}, {pipeline_mode = #tpu.pipeline_mode<synchronous>, transform_indices = @transform_2, window_bounds = array<i64: 1, 128>}, {transform_indices = @transform_3, window_bounds = array<i64: 8, 128>}]} {
    %c0_i32 = arith.constant 0 : i32
    %0 = arith.cmpi eq, %arg1, %c0_i32 : i32
    %1 = arith.extui %0 : i1 to i32
    %c0_i32_0 = arith.constant 0 : i32
    %2 = arith.cmpi ne, %1, %c0_i32_0 : i32
    scf.if %2 {
      %cst_9 = arith.constant 0.000000e+00 : f32
      %11 = vector.broadcast %cst_9 : f32 to vector<8x32xf32>
      %c0_10 = arith.constant 0 : index
      %c0_11 = arith.constant 0 : index
      %12 = vector.load %arg6[%c0_10, %c0_11] : memref<8x32xf32, #tpu.memory_space<vmem>>, vector<8x32xf32>
      tpu.vector_store %arg6[%c0_10, %c0_11], %11 {strides = array<i32>} : memref<8x32xf32, #tpu.memory_space<vmem>>, vector<8x32xf32>,
    } else {
    }
    %c0 = arith.constant 0 : index
    %c0_1 = arith.constant 0 : index
    %3 = vector.load %arg6[%c0, %c0_1] : memref<8x32xf32, #tpu.memory_space<vmem>>, vector<8x32xf32>
    %c0_2 = arith.constant 0 : index
    %c0_3 = arith.constant 0 : index
    %c0_4 = arith.constant 0 : index
    %4 = vector.load %arg2[%c0_2, %c0_3, %c0_4] : memref<8x32x256xf32, #tpu.memory_space<vmem>>, vector<8x32x256xf32>
    %cst = arith.constant dense<0.000000e+00> : vector<8x32xf32>
    %5 = vector.multi_reduction <add>, %4, %cst [2] : vector<8x32x256xf32> to vector<8x32xf32>
    %6 = arith.addf %3, %5 : vector<8x32xf32>
    %c0_5 = arith.constant 0 : index
    %c0_6 = arith.constant 0 : index
    %7 = vector.load %arg6[%c0_5, %c0_6] : memref<8x32xf32, #tpu.memory_space<vmem>>, vector<8x32xf32>
    tpu.vector_store %arg6[%c0_5, %c0_6], %6 {strides = array<i32>} : memref<8x32xf32, #tpu.memory_space<vmem>>, vector<8x32xf32>,
    %c0_i32_7 = arith.constant 0 : i32
    %8 = arith.cmpi eq, %arg1, %c0_i32_7 : i32
    %9 = arith.extui %8 : i1 to i32
    %c0_i32_8 = arith.constant 0 : i32
    %10 = arith.cmpi ne, %9, %c0_i32_8 : i32
    scf.if %10 {
      %c0_9 = arith.constant 0 : index
      %c0_10 = arith.constant 0 : index
      %11 = vector.load %arg6[%c0_9, %c0_10] : memref<8x32xf32, #tpu.memory_space<vmem>>, vector<8x32xf32>
      %c0_11 = arith.constant 0 : index
      %c0_12 = arith.constant 0 : index
      %12 = vector.load %arg3[%c0_11, %c0_12] : memref<32x128xf32, #tpu.memory_space<vmem>>, vector<32x128xf32>
      %cst_13 = arith.constant dense<0.000000e+00> : vector<8x128xf32>
      %13 = tpu.matmul %11, %12, %cst_13 {dimension_numbers = #tpu.dot_dimension_numbers<[1], [0], [0], [1], [0, 0, 1, 1], [], []>} : vector<8x32xf32>, vector<32x128xf32>, vector<8x128xf32> -> vector<8x128xf32>
      %c0_14 = arith.constant 0 : index
      %c0_15 = arith.constant 0 : index
      %14 = vector.load %arg4[%c0_14, %c0_15] : memref<1x128xf32, #tpu.memory_space<vmem>>, vector<1x128xf32>
      %15 = vector.broadcast %14 : vector<1x128xf32> to vector<8x128xf32>
      %16 = arith.addf %13, %15 : vector<8x128xf32>
      %c0_16 = arith.constant 0 : index
      %c0_17 = arith.constant 0 : index
      %17 = vector.load %arg5[%c0_16, %c0_17] : memref<8x128xf32, #tpu.memory_space<vmem>>, vector<8x128xf32>
      tpu.vector_store %arg5[%c0_16, %c0_17], %16 {strides = array<i32>} : memref<8x128xf32, #tpu.memory_space<vmem>>, vector<8x128xf32>,
    } else {
    }
    return
  }
  func.func @transform_0(%arg0: i32, %arg1: i32) -> (i32, i32, i32) {
    %c0_i32 = arith.constant 0 : i32
    %c0_i32_0 = arith.constant 0 : i32
    return %arg0, %c0_i32, %arg1 : i32, i32, i32
  }
  func.func @transform_1(%arg0: i32, %arg1: i32) -> (i32, i32) {
    %c0_i32 = arith.constant 0 : i32
    %c0_i32_0 = arith.constant 0 : i32
    %c0_i32_1 = arith.constant 0 : i32
    return %c0_i32, %c0_i32_0 : i32, i32
  }
  func.func @transform_2(%arg0: i32, %arg1: i32) -> (i32, i32) {
    %c0_i32 = arith.constant 0 : i32
    %c0_i32_0 = arith.constant 0 : i32
    %c0_i32_1 = arith.constant 0 : i32
    return %c0_i32, %c0_i32_0 : i32, i32
  }
  func.func @transform_3(%arg0: i32, %arg1: i32) -> (i32, i32) {
    %c0_i32 = arith.constant 0 : i32
    %c0_i32_0 = arith.constant 0 : i32
    return %arg0, %c0_i32 : i32, i32
  }
}

</mosaic_0001>

<llo_original>
// kernel: tpu_custom_call.1
$region0: #{tpu_custom_call.1}
  #allocation0 [shape = 'u32[]', space=smem, size = 0x4, offset = 0x4, fixed_abs, tag = 'smem constant byte address 0x4 - core index']
  #allocation1 [shape = 'u32[144,128]{1,0:T(1,128)}', space=vmem, size = 0x12000, scoped, tag = 'internal scratch']
  #allocation2 [shape = 'f32[8,32]{1,0:T(8,128)}', space=vmem, size = 0x1000, scoped, tag = 'scratch operand']
  %s0 = inlined_call_operand.hbm [shape: f32[8,32,256], index: 0, kind: input, shape index: {}]
  %s1 = inlined_call_operand.hbm [shape: f32[32,128], index: 1, kind: input, shape index: {}]
  %s2 = inlined_call_operand.vmem [shape: f32[1,128], index: 2, kind: input, shape index: {}]
  %s3 = inlined_call_operand.hbm [shape: f32[8,128], index: 3, kind: output, shape index: {}]
  %s4 = sld [smem:[#allocation0]]
  $region38: #{tpu_custom_call.1} parent=0
    _
  %s6 = ssub.s32 1, %s4
  %s7 = scalar_select 0, %s6, %s4
  $region1: #{tpu_custom_call.1} parent=0
    #allocation3 [shape = 'u8[262144]{0}', space=vmem, size = 0x40000, scoped, tag = 'input window, operand 0, single buffered']
    #allocation4 [shape = 's32[1]{0}', space=sflag, size = 0x4, scoped, tag = 'scoped memory for tpu_custom_call.1']
    #allocation5 [shape = 's32[1]{0}', space=sflag, size = 0x4, scoped, tag = 'scoped memory for tpu_custom_call.1']
    #allocation6 [shape = 'u8[16384]{0}', space=vmem, size = 0x4000, scoped, tag = 'input window, operand 1, single buffered']
    #allocation7 [shape = 's32[1]{0}', space=sflag, size = 0x4, scoped, tag = 'scoped memory for tpu_custom_call.1']
    #allocation8 [shape = 'u8[4096]{0}', space=vmem, size = 0x1000, scoped, tag = 'output window, operand 0, single buffered']
    %8 = vsyncpa [#allocation4], 0
    %9 = vsyncpa [#allocation7], 0
    %10 = vsyncpa [#allocation5], 0
    // Predicated region
    $region2: #{tpu_custom_call.1} parent=1 // pred_check
      _
    $region3: #{tpu_custom_call.1} parent=1 // pred_check_branch
      %12 = sbr.rel (0) target = $region5
    $region4: #{tpu_custom_call.1} parent=1 // pred_region
      %s14 = ssub.s32 8192, 8192
      %15 = vsyncadd [#allocation4], %s14
      %s16 = sshll.u32 [#allocation3], 4
      %s17 = int_to_ptr.vmem [resolvable:$true] %s16
      %22 = dma.hbm_to_vmem [thread:$0]  %s0, 8192, %s17, [#allocation4], 256, 256, 16
    $region5: #{tpu_custom_call.1} parent=1 // pred_fallthru
      _
    // Predicated region
    $region6: #{tpu_custom_call.1} parent=1 // pred_check
      _
    $region7: #{tpu_custom_call.1} parent=1 // pred_check_branch
      %24 = sbr.rel (0) target = $region9
    $region8: #{tpu_custom_call.1} parent=1 // pred_region
      %s26 = ssub.s32 512, 512
      %27 = vsyncadd [#allocation7], %s26
      %s28 = sshll.u32 [#allocation6], 4
      %s29 = int_to_ptr.vmem [resolvable:$true] %s28
      %34 = dma.hbm_to_vmem [thread:$0]  %s1, 512, %s29, [#allocation7], 128, 128, 8
    $region9: #{tpu_custom_call.1} parent=1 // pred_fallthru
      _
    // Predicated region
    $region10: #{tpu_custom_call.1} parent=1 // pred_check
      _
    $region11: #{tpu_custom_call.1} parent=1 // pred_check_branch
      %36 = sbr.rel (0) target = $region13
    $region12: #{tpu_custom_call.1} parent=1 // pred_region
      _
    $region13: #{tpu_custom_call.1} parent=1 // pred_fallthru
      _
    // Predicated region
    $region14: #{tpu_custom_call.1} parent=1 // pred_check
      _
    $region15: #{tpu_custom_call.1} parent=1 // pred_check_branch
      %38 = sbr.rel (0) target = $region17
    $region16: #{tpu_custom_call.1} parent=1 // pred_region
      %39 = dma.done [#allocation4], 8192
    $region17: #{tpu_custom_call.1} parent=1 // pred_fallthru
      _
    // Predicated region
    $region18: #{tpu_custom_call.1} parent=1 // pred_check
      _
    $region19: #{tpu_custom_call.1} parent=1 // pred_check_branch
      %41 = sbr.rel (0) target = $region21
    $region20: #{tpu_custom_call.1} parent=1 // pred_region
      %42 = dma.done [#allocation7], 512
    $region21: #{tpu_custom_call.1} parent=1 // pred_fallthru
      _
    %p43 = scmp.eq.s32.totalorder 0, 0
    // Predicated region
    $region22: #{tpu_custom_call.1} parent=1 // pred_check
      %p44 = pneg %p43
    $region23: #{tpu_custom_call.1} parent=1 // pred_check_branch
      %46 = sbr.rel (%p44) target = $region25
    $region24: #{tpu_custom_call.1} parent=1 // pred_region
      %vm47 = vcmask 261120
      %48 = vst.msk [vmem:[#allocation2] sm:$0xff] %vm47, 0.0
    $region25: #{tpu_custom_call.1} parent=1 // pred_fallthru
      _
    %v49 = vld [vmem:[#allocation2] sm:$0xff]
    %v50 = vld [vmem:[#allocation3] sm:$0xff]
    %v51 = vld [vmem:[#allocation3 + $0x8] sm:$0xff]
    %v52 = vld [vmem:[#allocation3 + $0x10] sm:$0xff]
    %v53 = vld [vmem:[#allocation3 + $0x18] sm:$0xff]
    %v54 = vld [vmem:[#allocation3 + $0x20] sm:$0xff]
    %v55 = vld [vmem:[#allocation3 + $0x28] sm:$0xff]
    %v56 = vld [vmem:[#allocation3 + $0x30] sm:$0xff]
    %v57 = vld [vmem:[#allocation3 + $0x38] sm:$0xff]
    %v58 = vld [vmem:[#allocation3 + $0x40] sm:$0xff]
    %v59 = vld [vmem:[#allocation3 + $0x48] sm:$0xff]
    %v60 = vld [vmem:[#allocation3 + $0x50] sm:$0xff]
    %v61 = vld [vmem:[#allocation3 + $0x58] sm:$0xff]
    %v62 = vld [vmem:[#allocation3 + $0x60] sm:$0xff]
    %v63 = vld [vmem:[#allocation3 + $0x68] sm:$0xff]
    %v64 = vld [vmem:[#allocation3 + $0x70] sm:$0xff]
    %v65 = vld [vmem:[#allocation3 + $0x78] sm:$0xff]
    %v66 = vld [vmem:[#allocation3 + $0x80] sm:$0xff]
    %v67 = vld [vmem:[#allocation3 + $0x88] sm:$0xff]
    %v68 = vld [vmem:[#allocation3 + $0x90] sm:$0xff]
    %v69 = vld [vmem:[#allocation3 + $0x98] sm:$0xff]
    %v70 = vld [vmem:[#allocation3 + $0xa0] sm:$0xff]
    %v71 = vld [vmem:[#allocation3 + $0xa8] sm:$0xff]
    %v72 = vld [vmem:[#allocation3 + $0xb0] sm:$0xff]
    %v73 = vld [vmem:[#allocation3 + $0xb8] sm:$0xff]
    %v74 = vld [vmem:[#allocation3 + $0xc0] sm:$0xff]
    %v75 = vld [vmem:[#allocation3 + $0xc8] sm:$0xff]
    %v76 = vld [vmem:[#allocation3 + $0xd0] sm:$0xff]
    %v77 = vld [vmem:[#allocation3 + $0xd8] sm:$0xff]
    %v78 = vld [vmem:[#allocation3 + $0xe0] sm:$0xff]
    %v79 = vld [vmem:[#allocation3 + $0xe8] sm:$0xff]
    %v80 = vld [vmem:[#allocation3 + $0xf0] sm:$0xff]
    %v81 = vld [vmem:[#allocation3 + $0xf8] sm:$0xff]
    %v82 = vld [vmem:[#allocation3 + $0x100] sm:$0xff]
    %v83 = vld [vmem:[#allocation3 + $0x108] sm:$0xff]
    %v84 = vld [vmem:[#allocation3 + $0x110] sm:$0xff]
    %v85 = vld [vmem:[#allocation3 + $0x118] sm:$0xff]
    %v86 = vld [vmem:[#allocation3 + $0x120] sm:$0xff]
    %v87 = vld [vmem:[#allocation3 + $0x128] sm:$0xff]
    %v88 = vld [vmem:[#allocation3 + $0x130] sm:$0xff]
    %v89 = vld [vmem:[#allocation3 + $0x138] sm:$0xff]
    %v90 = vld [vmem:[#allocation3 + $0x140] sm:$0xff]
    %v91 = vld [vmem:[#allocation3 + $0x148] sm:$0xff]
    %v92 = vld [vmem:[#allocation3 + $0x150] sm:$0xff]
    %v93 = vld [vmem:[#allocation3 + $0x158] sm:$0xff]
    %v94 = vld [vmem:[#allocation3 + $0x160] sm:$0xff]
    %v95 = vld [vmem:[#allocation3 + $0x168] sm:$0xff]
    %v96 = vld [vmem:[#allocation3 + $0x170] sm:$0xff]
    %v97 = vld [vmem:[#allocation3 + $0x178] sm:$0xff]
    %v98 = vld [vmem:[#allocation3 + $0x180] sm:$0xff]
    %v99 = vld [vmem:[#allocation3 + $0x188] sm:$0xff]
    %v100 = vld [vmem:[#allocation3 + $0x190] sm:$0xff]
    %v101 = vld [vmem:[#allocation3 + $0x198] sm:$0xff]
    %v102 = vld [vmem:[#allocation3 + $0x1a0] sm:$0xff]
    %v103 = vld [vmem:[#allocation3 + $0x1a8] sm:$0xff]
    %v104 = vld [vmem:[#allocation3 + $0x1b0] sm:$0xff]
    %v105 = vld [vmem:[#allocation3 + $0x1b8] sm:$0xff]
    %v106 = vld [vmem:[#allocation3 + $0x1c0] sm:$0xff]
    %v107 = vld [vmem:[#allocation3 + $0x1c8] sm:$0xff]
    %v108 = vld [vmem:[#allocation3 + $0x1d0] sm:$0xff]
    %v109 = vld [vmem:[#allocation3 + $0x1d8] sm:$0xff]
    %v110 = vld [vmem:[#allocation3 + $0x1e0] sm:$0xff]
    %v111 = vld [vmem:[#allocation3 + $0x1e8] sm:$0xff]
    %v112 = vld [vmem:[#allocation3 + $0x1f0] sm:$0xff]
    %v113 = vld [vmem:[#allocation3 + $0x1f8] sm:$0xff]
    %v114 = vadd.f32 %v50, %v51
    %115 = vadd.xlane.f32.xlu0 %v114
    %v116 = vpop.xlane.xlu0 %115
    %v117 = vadd.f32 %v52, %v53
    %118 = vadd.xlane.f32.xlu0 %v117
    %v119 = vpop.xlane.xlu0 %118
    %v120 = vadd.f32 %v54, %v55
    %121 = vadd.xlane.f32.xlu0 %v120
    %v122 = vpop.xlane.xlu0 %121
    %v123 = vadd.f32 %v56, %v57
    %124 = vadd.xlane.f32.xlu0 %v123
    %v125 = vpop.xlane.xlu0 %124
    %v126 = vadd.f32 %v58, %v59
    %127 = vadd.xlane.f32.xlu0 %v126
    %v128 = vpop.xlane.xlu0 %127
    %v129 = vadd.f32 %v60, %v61
    %130 = vadd.xlane.f32.xlu0 %v129
    %v131 = vpop.xlane.xlu0 %130
    %v132 = vadd.f32 %v62, %v63
    %133 = vadd.xlane.f32.xlu0 %v132
    %v134 = vpop.xlane.xlu0 %133
    %v135 = vadd.f32 %v64, %v65
    %136 = vadd.xlane.f32.xlu0 %v135
    %v137 = vpop.xlane.xlu0 %136
    %v138 = vadd.f32 %v66, %v67
    %139 = vadd.xlane.f32.xlu0 %v138
    %v140 = vpop.xlane.xlu0 %139
    %v141 = vadd.f32 %v68, %v69
    %142 = vadd.xlane.f32.xlu0 %v141
    %v143 = vpop.xlane.xlu0 %142
    %v144 = vadd.f32 %v70, %v71
    %145 = vadd.xlane.f32.xlu0 %v144
    %v146 = vpop.xlane.xlu0 %145
    %v147 = vadd.f32 %v72, %v73
    %148 = vadd.xlane.f32.xlu0 %v147
    %v149 = vpop.xlane.xlu0 %148
    %v150 = vadd.f32 %v74, %v75
    %151 = vadd.xlane.f32.xlu0 %v150
    %v152 = vpop.xlane.xlu0 %151
    %v153 = vadd.f32 %v76, %v77
    %154 = vadd.xlane.f32.xlu0 %v153
    %v155 = vpop.xlane.xlu0 %154
    %v156 = vadd.f32 %v78, %v79
    %157 = vadd.xlane.f32.xlu0 %v156
    %v158 = vpop.xlane.xlu0 %157
    %v159 = vadd.f32 %v80, %v81
    %160 = vadd.xlane.f32.xlu0 %v159
    %v161 = vpop.xlane.xlu0 %160
    %v162 = vadd.f32 %v82, %v83
    %163 = vadd.xlane.f32.xlu0 %v162
    %v164 = vpop.xlane.xlu0 %163
    %v165 = vadd.f32 %v84, %v85
    %166 = vadd.xlane.f32.xlu0 %v165
    %v167 = vpop.xlane.xlu0 %166
    %v168 = vadd.f32 %v86, %v87
    %169 = vadd.xlane.f32.xlu0 %v168
    %v170 = vpop.xlane.xlu0 %169
    %v171 = vadd.f32 %v88, %v89
    %172 = vadd.xlane.f32.xlu0 %v171
    %v173 = vpop.xlane.xlu0 %172
    %v174 = vadd.f32 %v90, %v91
    %175 = vadd.xlane.f32.xlu0 %v174
    %v176 = vpop.xlane.xlu0 %175
    %v177 = vadd.f32 %v92, %v93
    %178 = vadd.xlane.f32.xlu0 %v177
    %v179 = vpop.xlane.xlu0 %178
    %v180 = vadd.f32 %v94, %v95
    %181 = vadd.xlane.f32.xlu0 %v180
    %v182 = vpop.xlane.xlu0 %181
    %v183 = vadd.f32 %v96, %v97
    %184 = vadd.xlane.f32.xlu0 %v183
    %v185 = vpop.xlane.xlu0 %184
    %v186 = vadd.f32 %v98, %v99
    %187 = vadd.xlane.f32.xlu0 %v186
    %v188 = vpop.xlane.xlu0 %187
    %v189 = vadd.f32 %v100, %v101
    %190 = vadd.xlane.f32.xlu0 %v189
    %v191 = vpop.xlane.xlu0 %190
    %v192 = vadd.f32 %v102, %v103
    %193 = vadd.xlane.f32.xlu0 %v192
    %v194 = vpop.xlane.xlu0 %193
    %v195 = vadd.f32 %v104, %v105
    %196 = vadd.xlane.f32.xlu0 %v195
    %v197 = vpop.xlane.xlu0 %196
    %v198 = vadd.f32 %v106, %v107
    %199 = vadd.xlane.f32.xlu0 %v198
    %v200 = vpop.xlane.xlu0 %199
    %v201 = vadd.f32 %v108, %v109
    %202 = vadd.xlane.f32.xlu0 %v201
    %v203 = vpop.xlane.xlu0 %202
    %v204 = vadd.f32 %v110, %v111
    %205 = vadd.xlane.f32.xlu0 %v204
    %v206 = vpop.xlane.xlu0 %205
    %v207 = vadd.f32 %v112, %v113
    %208 = vadd.xlane.f32.xlu0 %v207
    %v209 = vpop.xlane.xlu0 %208
    %v242 = vlaneseq
    %v243 = vand.u32 %v242, 127
    %v244 = vlaneseq
    %v245 = vshrl.u32 %v244, 7
    %v246 = vsub.s32 %v243, %v245
    %v247 = vrot.slane %v116, %v246
    %v248 = vadd.s32 %v243, 4294967288
    %v249 = vlaneseq
    %v250 = vshrl.u32 %v249, 7
    %v251 = vsub.s32 %v248, %v250
    %v252 = vrot.slane %v119, %v251
    %vm253 = vcmask 130112
    %v254 = vsel %vm253, %v252, %v247
    %v255 = vadd.s32 %v243, 4294967280
    %v256 = vlaneseq
    %v257 = vshrl.u32 %v256, 7
    %v258 = vsub.s32 %v255, %v257
    %v259 = vrot.slane %v122, %v258
    %vm260 = vcmask 195712
    %v261 = vsel %vm260, %v259, %v254
    %v262 = vadd.s32 %v243, 4294967272
    %v263 = vlaneseq
    %v264 = vshrl.u32 %v263, 7
    %v265 = vsub.s32 %v262, %v264
    %v266 = vrot.slane %v125, %v265
    %vm267 = vcmask 261312
    %v268 = vsel %vm267, %v266, %v261
    %v269 = vlaneseq
    %v270 = vshrl.u32 %v269, 7
    %v271 = vsub.s32 %v243, %v270
    %v272 = vrot.slane %v128, %v271
    %v273 = vlaneseq
    %v274 = vshrl.u32 %v273, 7
    %v275 = vsub.s32 %v248, %v274
    %v276 = vrot.slane %v131, %v275
    %v277 = vsel %vm253, %v276, %v272
    %v278 = vlaneseq
    %v279 = vshrl.u32 %v278, 7
    %v280 = vsub.s32 %v255, %v279
    %v281 = vrot.slane %v134, %v280
    %v282 = vsel %vm260, %v281, %v277
    %v283 = vlaneseq
    %v284 = vshrl.u32 %v283, 7
    %v285 = vsub.s32 %v262, %v284
    %v286 = vrot.slane %v137, %v285
    %v287 = vsel %vm267, %v286, %v282
    %v288 = vlaneseq
    %v289 = vshrl.u32 %v288, 7
    %v290 = vsub.s32 %v243, %v289
    %v291 = vrot.slane %v140, %v290
    %v292 = vlaneseq
    %v293 = vshrl.u32 %v292, 7
    %v294 = vsub.s32 %v248, %v293
    %v295 = vrot.slane %v143, %v294
    %v296 = vsel %vm253, %v295, %v291
    %v297 = vlaneseq
    %v298 = vshrl.u32 %v297, 7
    %v299 = vsub.s32 %v255, %v298
    %v300 = vrot.slane %v146, %v299
    %v301 = vsel %vm260, %v300, %v296
    %v302 = vlaneseq
    %v303 = vshrl.u32 %v302, 7
    %v304 = vsub.s32 %v262, %v303
    %v305 = vrot.slane %v149, %v304
    %v306 = vsel %vm267, %v305, %v301
    %v307 = vlaneseq
    %v308 = vshrl.u32 %v307, 7
    %v309 = vsub.s32 %v243, %v308
    %v310 = vrot.slane %v152, %v309
    %v311 = vlaneseq
    %v312 = vshrl.u32 %v311, 7
    %v313 = vsub.s32 %v248, %v312
    %v314 = vrot.slane %v155, %v313
    %v315 = vsel %vm253, %v314, %v310
    %v316 = vlaneseq
    %v317 = vshrl.u32 %v316, 7
    %v318 = vsub.s32 %v255, %v317
    %v319 = vrot.slane %v158, %v318
    %v320 = vsel %vm260, %v319, %v315
    %v321 = vlaneseq
    %v322 = vshrl.u32 %v321, 7
    %v323 = vsub.s32 %v262, %v322
    %v324 = vrot.slane %v161, %v323
    %v325 = vsel %vm267, %v324, %v320
    %v326 = vlaneseq
    %v327 = vshrl.u32 %v326, 7
    %v328 = vsub.s32 %v243, %v327
    %v329 = vrot.slane %v164, %v328
    %v330 = vlaneseq
    %v331 = vshrl.u32 %v330, 7
    %v332 = vsub.s32 %v248, %v331
    %v333 = vrot.slane %v167, %v332
    %v334 = vsel %vm253, %v333, %v329
    %v335 = vlaneseq
    %v336 = vshrl.u32 %v335, 7
    %v337 = vsub.s32 %v255, %v336
    %v338 = vrot.slane %v170, %v337
    %v339 = vsel %vm260, %v338, %v334
    %v340 = vlaneseq
    %v341 = vshrl.u32 %v340, 7
    %v342 = vsub.s32 %v262, %v341
    %v343 = vrot.slane %v173, %v342
    %v344 = vsel %vm267, %v343, %v339
    %v345 = vlaneseq
    %v346 = vshrl.u32 %v345, 7
    %v347 = vsub.s32 %v243, %v346
    %v348 = vrot.slane %v176, %v347
    %v349 = vlaneseq
    %v350 = vshrl.u32 %v349, 7
    %v351 = vsub.s32 %v248, %v350
    %v352 = vrot.slane %v179, %v351
    %v353 = vsel %vm253, %v352, %v348
    %v354 = vlaneseq
    %v355 = vshrl.u32 %v354, 7
    %v356 = vsub.s32 %v255, %v355
    %v357 = vrot.slane %v182, %v356
    %v358 = vsel %vm260, %v357, %v353
    %v359 = vlaneseq
    %v360 = vshrl.u32 %v359, 7
    %v361 = vsub.s32 %v262, %v360
    %v362 = vrot.slane %v185, %v361
    %v363 = vsel %vm267, %v362, %v358
    %v364 = vlaneseq
    %v365 = vshrl.u32 %v364, 7
    %v366 = vsub.s32 %v243, %v365
    %v367 = vrot.slane %v188, %v366
    %v368 = vlaneseq
    %v369 = vshrl.u32 %v368, 7
    %v370 = vsub.s32 %v248, %v369
    %v371 = vrot.slane %v191, %v370
    %v372 = vsel %vm253, %v371, %v367
    %v373 = vlaneseq
    %v374 = vshrl.u32 %v373, 7
    %v375 = vsub.s32 %v255, %v374
    %v376 = vrot.slane %v194, %v375
    %v377 = vsel %vm260, %v376, %v372
    %v378 = vlaneseq
    %v379 = vshrl.u32 %v378, 7
    %v380 = vsub.s32 %v262, %v379
    %v381 = vrot.slane %v197, %v380
    %v382 = vsel %vm267, %v381, %v377
    %v383 = vlaneseq
    %v384 = vshrl.u32 %v383, 7
    %v385 = vsub.s32 %v243, %v384
    %v386 = vrot.slane %v200, %v385
    %v387 = vlaneseq
    %v388 = vshrl.u32 %v387, 7
    %v389 = vsub.s32 %v248, %v388
    %v390 = vrot.slane %v203, %v389
    %v391 = vsel %vm253, %v390, %v386
    %v392 = vlaneseq
    %v393 = vshrl.u32 %v392, 7
    %v394 = vsub.s32 %v255, %v393
    %v395 = vrot.slane %v206, %v394
    %v396 = vsel %vm260, %v395, %v391
    %v397 = vlaneseq
    %v398 = vshrl.u32 %v397, 7
    %v399 = vsub.s32 %v262, %v398
    %v400 = vrot.slane %v209, %v399
    %v401 = vsel %vm267, %v400, %v396
    %vm402 = vcmask 1041409
    %v403 = vsel %vm402, %v287, %v268
    %vm404 = vcmask 1042434
    %v405 = vsel %vm404, %v306, %v403
    %vm406 = vcmask 1043459
    %v407 = vsel %vm406, %v325, %v405
    %vm408 = vcmask 1044484
    %v409 = vsel %vm408, %v344, %v407
    %vm410 = vcmask 1045509
    %v411 = vsel %vm410, %v363, %v409
    %vm412 = vcmask 1046534
    %v413 = vsel %vm412, %v382, %v411
    %vm414 = vcmask 1047559
    %v415 = vsel %vm414, %v401, %v413
    %v417 = vadd.f32 %v49, %v415
    %vm418 = vcmask 261120
    %419 = vst.msk [vmem:[#allocation2] sm:$0xff] %vm418, %v417
    // Predicated region
    $region26: #{tpu_custom_call.1} parent=1 // pred_check
      %p420 = pneg %p43
    $region27: #{tpu_custom_call.1} parent=1 // pred_check_branch
      %422 = sbr.rel (%p420) target = $region29
    $region28: #{tpu_custom_call.1} parent=1 // pred_region
      %v423 = vld [vmem:[#allocation2] sm:$0xff]
      %v424 = vld [vmem:[#allocation6] sm:$0xff]
      %v425 = vld [vmem:[#allocation6 + $0x8] sm:$0xff]
      %v426 = vld [vmem:[#allocation6 + $0x10] sm:$0xff]
      %v427 = vld [vmem:[#allocation6 + $0x18] sm:$0xff]
      %v428 = vld [vmem:[%s2] sm:$0x1]
      %v430 = vlaneseq
      %v431 = vshrl.u32 %v430, 7
      %v432 = vsub.s32 0, %v431
      %v433 = vrot.slane %v428, %v432
      %v436 = vsel %vm418, %v423, 0
      %438 = vmatprep.subr.mxu0 0.0
      %439 = vmatpush1.msra.mxu0 %v424
      %440 = vmatprep.subr.mxu0 0.0
      %441 = vmatpush1.msra.mxu0 %v425
      %442 = vmatprep.subr.mxu0 0.0
      %443 = vmatpush1.msra.mxu0 %v426
      %444 = vmatprep.subr.mxu0 0.0
      %445 = vmatpush1.msra.mxu0 %v427
      %446 = vmatprep.subr.mxu0 0.0
      %447 = vmatpush1.msra.mxu0 0.0
      %448 = vmatprep.subr.mxu0 0.0
      %449 = vmatpush1.msra.mxu0 0.0
      %450 = vmatprep.subr.mxu0 0.0
      %451 = vmatpush1.msra.mxu0 0.0
      %452 = vmatprep.subr.mxu0 0.0
      %453 = vmatpush1.msra.mxu0 0.0
      %454 = vmatprep.subr.mxu0 0.0
      %455 = vmatpush1.msra.mxu0 0.0
      %456 = vmatprep.subr.mxu0 0.0
      %457 = vmatpush1.msra.mxu0 0.0
      %458 = vmatprep.subr.mxu0 0.0
      %459 = vmatpush1.msra.mxu0 0.0
      %460 = vmatprep.subr.mxu0 0.0
      %461 = vmatpush1.msra.mxu0 0.0
      %462 = vmatprep.subr.mxu0 0.0
      %463 = vmatpush1.msra.mxu0 0.0
      %464 = vmatprep.subr.mxu0 0.0
      %465 = vmatpush1.msra.mxu0 0.0
      %466 = vmatprep.subr.mxu0 0.0
      %467 = vmatpush1.msra.mxu0 0.0
      %468 = vmatprep.subr.mxu0 0.0
      %469 = vmatpush1.msra.mxu0 0.0
      %470 = vmatprep.subr.mxu0 0.0
      %471 = vmatpush1.msra.mxu0 0.0
      %472 = vmatprep.subr.mxu0 0.0
      %473 = vmatpush1.msra.mxu0 0.0
      %474 = vmatprep.subr.mxu0 0.0
      %475 = vmatpush1.msra.mxu0 0.0
      %476 = vmatprep.subr.mxu0 0.0
      %477 = vmatpush1.msra.mxu0 0.0
      %478 = vmatprep.subr.mxu0 0.0
      %479 = vmatpush1.msra.mxu0 0.0
      %480 = vmatprep.subr.mxu0 0.0
      %481 = vmatpush1.msra.mxu0 0.0
      %482 = vmatprep.subr.mxu0 0.0
      %483 = vmatpush1.msra.mxu0 0.0
      %484 = vmatprep.subr.mxu0 0.0
      %485 = vmatpush1.msra.mxu0 0.0
      %486 = vmatprep.subr.mxu0 0.0
      %487 = vmatpush1.msra.mxu0 0.0
      %488 = vmatprep.subr.mxu0 0.0
      %489 = vmatpush1.msra.mxu0 0.0
      %490 = vmatprep.subr.mxu0 0.0
      %491 = vmatpush1.msra.mxu0 0.0
      %492 = vmatprep.subr.mxu0 0.0
      %493 = vmatpush1.msra.mxu0 0.0
      %494 = vmatprep.subr.mxu0 0.0
      %495 = vmatpush1.msra.mxu0 0.0
      %496 = vmatprep.subr.mxu0 0.0
      %497 = vmatpush1.msra.mxu0 0.0
      %498 = vmatprep.subr.mxu0 0.0
      %499 = vmatpush1.msra.mxu0 0.0
      %500 = vmatprep.subr.mxu0 0.0
      %501 = vmatpush1.msra.mxu0 0.0
      %502 = vmatprep.mubr.f32.mxu0 0.0
      %503 = vmatmul.mubr.f32.gmra.mrb[0].mxu0 %v436
      %v504 = vpop.f32.mrb[0].mxu0
      %v505 = vadd.f32 %v433, %v504
      %v506 = vpop.f32.mrb[0].mxu0
      %507 = vdwg.mxu0
      %508 = vst [vmem:[#allocation8] sm:$0xff] %v505
    $region29: #{tpu_custom_call.1} parent=1 // pred_fallthru
      _
    // Predicated region
    $region30: #{tpu_custom_call.1} parent=1 // pred_check
      _
    $region31: #{tpu_custom_call.1} parent=1 // pred_check_branch
      %510 = sbr.rel (0) target = $region33
    $region32: #{tpu_custom_call.1} parent=1 // pred_region
      %s512 = ssub.s32 128, 128
      %513 = vsyncadd [#allocation5], %s512
      %s515 = sshll.u32 [#allocation8], 4
      %s516 = int_to_ptr.vmem [resolvable:$true] %s515
      %518 = dma.vmem_to_hbm [thread:$0]  %s516, 128, %s3, [#allocation5]
    $region33: #{tpu_custom_call.1} parent=1 // pred_fallthru
      _
    // Predicated region
    $region34: #{tpu_custom_call.1} parent=1 // pred_check
      _
    $region35: #{tpu_custom_call.1} parent=1 // pred_check_branch
      %520 = sbr.rel (0) target = $region37
    $region36: #{tpu_custom_call.1} parent=1 // pred_region
      %521 = dma.done [#allocation5], 128
    $region37: #{tpu_custom_call.1} parent=1 // pred_fallthru
      _
    %522 = vsyncpa [#allocation4], 1
    %523 = vsyncpa [#allocation7], 1
    %524 = vsyncpa [#allocation5], 1

</llo_original>
